<compile_context>
chip_gen: v6e
topology: v6e:2x2x1
jax: 0.10.0
libtpu: 0.0.40
codegen_flags: <defaults>
</compile_context>

<pallas_src>
import functools
import math

import jax
import jax.numpy as jnp
from jax import lax
from jax.experimental import pallas as pl
from jax.experimental.pallas import tpu as pltpu

_LOG_TWO_PI = math.log(2.0 * math.pi)
_SUBLANES = 8
_GROUP_F32_BYTES = 256 << 10     # max f32 live temps per inner row-group
_PALLAS_MIN_BYTES = 1 << 20      # below this, a plain XLA reduction wins


def _tpu_defaults():
    """Best-effort (num_shards, tile_bytes, vmem_limit_bytes) per generation."""
    vmem_bytes = 128 << 20
    try:
        vmem_bytes = int(getattr(pltpu.get_tpu_info(),
                                 "vmem_capacity_bytes", vmem_bytes))
    except Exception:
        pass
    if vmem_bytes <= (64 << 20):
        # v7x: 2 TensorCores, 64 MiB VMEM, ~3.2 TB/s HBM -> bigger tiles so
        # the ~0.35 us/step pipeline overhead stays <10%, but keep the
        # double-buffered input well under 64 MiB.
        return 2, 12 << 20, 48 << 20
    # v5e / v6e: 1 TensorCore, 128 MiB VMEM. 4 MiB tiles are at the roofline
    # knee; the explicit 32 MiB scoped limit covers v5e's 16 MiB default.
    return 1, 4 << 20, 32 << 20


def _round_down(x, m):
    return (x // m) * m


def _make_sumsq_kernel(*, B, D, tb, rpg, n_groups, inner, needs_mask):
    """Accumulate sum over the tile's rows of z**2 into an (8, D) f32 block.

    The (8, D) lane/sublane structure is kept resident so every per-step op is
    a pure VPU multiply-add (no cross-lane XLU reduce, no narrow masked store
    on the steady-state path); the tiny cross-lane fold happens once, in JAX.
    """
    unroll = True if n_groups <= 8 else 4

    def kernel(z_ref, acc_ref):
        step = pl.program_id(1)

        @pl.when(step == 0)
        def _init():
            acc_ref[...] = jnp.zeros_like(acc_ref)

        tile_row0 = (pl.program_id(0) * inner + step) * tb

        def body(g, carry):
            r0 = pl.multiple_of(g * rpg, rpg)
            zg = z_ref[pl.ds(r0, rpg), :].astype(jnp.float32)
            if needs_mask:
                # Rows past the true batch size hold unspecified boundary-DMA
                # bytes; select them to zero BEFORE squaring (NaN-safe).
                row = tile_row0 + r0 + lax.broadcasted_iota(
                    jnp.int32, (rpg, 1), 0)
                zg = jnp.where(row < B, zg, 0.0)
            zz = zg * zg
            # Fold the group's sublane blocks with element-wise VPU adds into
            # a vreg-resident carry (no per-group VMEM read-modify-write).
            return carry + zz.reshape(rpg // _SUBLANES, _SUBLANES, D).sum(axis=0)

        part = lax.fori_loop(0, n_groups, body,
                             jnp.zeros((_SUBLANES, D), jnp.float32),
                             unroll=unroll)
        acc_ref[...] += part

    return kernel


@functools.partial(
    jax.jit,
    static_argnames=("avg", "use_pallas", "num_shards", "target_tile_bytes",
                     "vmem_limit_bytes"))
def gaussian_prior_loss(z, log_scaling_factors, *, avg=True, use_pallas=None,
                        num_shards=None, target_tile_bytes=None,
                        vmem_limit_bytes=None):
    """Pallas implementation of GaussianPriorLoss.forward.

    z: [B, D] latent batch (streamed in its native dtype, e.g. bf16).
    log_scaling_factors: [D] logged scaling factors.
    Returns the mean (avg=True) or sum of the per-sample negative
    log-likelihood as a float32 scalar.
    """
    B, D = z.shape
    itemsize = jnp.dtype(z.dtype).itemsize

    def_shards, def_tile, def_vmem = _tpu_defaults()
    num_shards = def_shards if num_shards is None else int(num_shards)
    target_tile_bytes = def_tile if target_tile_bytes is None else target_tile_bytes
    vmem_limit_bytes = def_vmem if vmem_limit_bytes is None else vmem_limit_bytes

    # Sublane granularity of the *native* dtype: f32 -> 8, bf16 -> 16, i8 -> 32.
    sub_mult = max(_SUBLANES, 32 // itemsize)

    if use_pallas is None:
        use_pallas = B * D * itemsize >= _PALLAS_MIN_BYTES
    # A batch smaller than one sublane group, or rows too wide to tile along
    # the batch axis alone, is handled by plain (fused) XLA instead.
    if B < sub_mult or 2 * sub_mult * D * itemsize > vmem_limit_bytes:
        use_pallas = False

    if not use_pallas:
        zf = z.astype(jnp.float32)
        sum_sq = jnp.sum(zf * zf)
    else:
        # ---- batch tiling (native dtype; no host-side pad / reshape) ------
        rows_target = max(sub_mult,
                          _round_down(target_tile_bytes // (D * itemsize),
                                      sub_mult))
        rows_target = min(rows_target, _round_down(B, sub_mult))
        # Inner row-group: bounds live f32 temporaries per fori_loop step.
        rpg = max(sub_mult,
                  min(rows_target,
                      _round_down(_GROUP_F32_BYTES // (D * 4), sub_mult)))
        tb = max(rpg, _round_down(rows_target, rpg))
        n_groups = tb // rpg

        n_tiles = pl.cdiv(B, tb)
        shards = max(1, min(num_shards, n_tiles))
        inner = pl.cdiv(n_tiles, shards)
        # Any over-coverage of the batch (boundary block / phantom shard tile)
        # reads unspecified bytes -> mask rows >= B inside the kernel.
        needs_mask = (shards * inner * tb) != B

        kernel = _make_sumsq_kernel(B=B, D=D, tb=tb, rpg=rpg,
                                    n_groups=n_groups, inner=inner,
                                    needs_mask=needs_mask)

        partials = pl.pallas_call(
            kernel,
            out_shape=jax.ShapeDtypeStruct((shards * _SUBLANES, D),
                                           jnp.float32),
            grid=(shards, inner),
            in_specs=[
                pl.BlockSpec(
                    (tb, D),
                    # Clamp so phantom tiles (shards*inner > n_tiles) re-read
                    # the last valid block; their rows are fully masked.
                    lambda c, i: (jnp.minimum(c * inner + i, n_tiles - 1), 0)),
            ],
            # Per-shard resident (8, D) accumulator; folded (cheaply) in JAX.
            out_specs=pl.BlockSpec((_SUBLANES, D), lambda c, i: (c, 0)),
            compiler_params=pltpu.CompilerParams(
                dimension_semantics=("parallel", "arbitrary"),
                vmem_limit_bytes=vmem_limit_bytes,
            ),
        )(z)
        sum_sq = jnp.sum(partials)

    # Closed-form scalar epilogue (fused into this jit):
    #   nll_i = 0.5*sum_d z_i^2 + 0.5*D*log(2*pi) - sum_d log s_d
    ls_sum = jnp.sum(log_scaling_factors.astype(jnp.float32))
    total_nll = 0.5 * sum_sq + B * (0.5 * D * _LOG_TWO_PI - ls_sum)
    return total_nll / B if avg else total_nll


def _reference(z, log_scaling_factors, avg=True):
    """Pure-JAX reference matching the PyTorch module semantics."""
    zf = z.astype(jnp.float32)
    lsf = log_scaling_factors.astype(jnp.float32)
    D = zf.shape[1]
    ll = -0.5 * jnp.sum(zf * zf, axis=1) - D * 0.5 * jnp.float32(_LOG_TWO_PI)
    nll = -(ll + jnp.sum(lsf))
    return jnp.mean(nll) if avg else jnp.sum(nll)


if __name__ == "__main__":
    key = jax.random.PRNGKey(0)
    k_z, k_s, k_z2 = jax.random.split(key, 3)

    # Small [B, D] latent batch, as the module's forward implies.
    B, D = 16, 32
    z = jax.random.normal(k_z, (B, D), dtype=jnp.float32)
    log_scaling_factors = 0.1 * jax.random.normal(k_s, (D,), dtype=jnp.float32)

    # Force the Pallas path even at this tiny size (tiny target tile -> a
    # multi-step grid, exercising the resident-accumulator pipeline).
    out_avg = jax.block_until_ready(
        gaussian_prior_loss(z, log_scaling_factors, avg=True,
                            use_pallas=True, target_tile_bytes=1024))
    out_sum = jax.block_until_ready(
        gaussian_prior_loss(z, log_scaling_factors, avg=False,
                            use_pallas=True, target_tile_bytes=1024))
    ref_avg = _reference(z, log_scaling_factors, avg=True)
    ref_sum = _reference(z, log_scaling_factors, avg=False)
    assert jnp.allclose(out_avg, ref_avg, rtol=1e-5, atol=1e-4), (out_avg, ref_avg)
    assert jnp.allclose(out_sum, ref_sum, rtol=1e-5, atol=1e-3), (out_sum, ref_sum)

    # bf16 streaming + ragged batch (B % tile != 0 exercises the in-kernel
    # row mask that replaced the host-side zero pad).
    B2 = 300
    z2 = jax.random.normal(k_z2, (B2, D), dtype=jnp.bfloat16)
    out_bf16 = jax.block_until_ready(
        gaussian_prior_loss(z2, log_scaling_factors, avg=True,
                            use_pallas=True, target_tile_bytes=4096))
    ref_bf16 = _reference(z2, log_scaling_factors, avg=True)
    assert jnp.allclose(out_bf16, ref_bf16, rtol=2e-3, atol=2e-3), (out_bf16, ref_bf16)

    # Default (auto) path: tiny input -> fused pure-JAX reduction, no
    # pallas_call launch overhead.
    out_auto = jax.block_until_ready(gaussian_prior_loss(z, log_scaling_factors))
    assert jnp.allclose(out_auto, ref_avg, rtol=1e-5, atol=1e-4), (out_auto, ref_avg)

    print("KERNEL_OK")
</pallas_src>

<mosaic_0001>
module attributes {stable_mosaic.version = 11 : i64} {
  func.func @kernel(%arg0: i32, %arg1: i32, %arg2: memref<8x32xf32, #tpu.memory_space<vmem>>, %arg3: memref<8x32xf32, #tpu.memory_space<vmem>>) attributes {dimension_semantics = [#tpu.dimension_semantics<parallel>, #tpu.dimension_semantics<arbitrary>], iteration_bounds = array<i64: 1, 2>, scalar_prefetch = 0 : i64, scratch_operands = 0 : i64, tpu.core_type = #tpu.core_type<tc>, window_params = [{transform_indices = @transform_0, window_bounds = array<i64: 8, 32>}, {transform_indices = @transform_1, window_bounds = array<i64: 8, 32>}]} {
    %c0_i32 = arith.constant 0 : i32
    %0 = arith.cmpi eq, %arg1, %c0_i32 : i32
    %1 = arith.extui %0 : i1 to i32
    %c0_i32_0 = arith.constant 0 : i32
    %2 = arith.cmpi ne, %1, %c0_i32_0 : i32
    scf.if %2 {
      %cst_7 = arith.constant 0.000000e+00 : f32
      %15 = vector.broadcast %cst_7 : f32 to vector<8x32xf32>
      %c0_8 = arith.constant 0 : index
      %c0_9 = arith.constant 0 : index
      %16 = vector.load %arg3[%c0_8, %c0_9] : memref<8x32xf32, #tpu.memory_space<vmem>>, vector<8x32xf32>
      tpu.vector_store %arg3[%c0_8, %c0_9], %15 {strides = array<i32>} : memref<8x32xf32, #tpu.memory_space<vmem>>, vector<8x32xf32>,
    } else {
    }
    %cst = arith.constant 0.000000e+00 : f32
    %3 = vector.broadcast %cst : f32 to vector<8x32xf32>
    %c0_i32_1 = arith.constant 0 : i32
    %c8_i32 = arith.constant 8 : i32
    %4 = arith.muli %c0_i32_1, %c8_i32 : i32
    %5 = tpu.assume_multiple %4, 8 : i32
    %6 = arith.index_cast %5 : i32 to index
    %c0 = arith.constant 0 : index
    %7 = vector.load %arg2[%6, %c0] : memref<8x32xf32, #tpu.memory_space<vmem>>, vector<8x32xf32>
    %8 = arith.mulf %7, %7 : vector<8x32xf32>
    %9 = vector.shape_cast %8 : vector<8x32xf32> to vector<1x8x32xf32>
    %cst_2 = arith.constant dense<0.000000e+00> : vector<8x32xf32>
    %10 = vector.multi_reduction <add>, %9, %cst_2 [0] : vector<1x8x32xf32> to vector<8x32xf32>
    %11 = arith.addf %3, %10 : vector<8x32xf32>
    %c1_i32 = arith.constant 1 : i32
    %c0_3 = arith.constant 0 : index
    %c0_4 = arith.constant 0 : index
    %12 = vector.load %arg3[%c0_3, %c0_4] : memref<8x32xf32, #tpu.memory_space<vmem>>, vector<8x32xf32>
    %13 = arith.addf %12, %11 : vector<8x32xf32>
    %c0_5 = arith.constant 0 : index
    %c0_6 = arith.constant 0 : index
    %14 = vector.load %arg3[%c0_5, %c0_6] : memref<8x32xf32, #tpu.memory_space<vmem>>, vector<8x32xf32>
    tpu.vector_store %arg3[%c0_5, %c0_6], %13 {strides = array<i32>} : memref<8x32xf32, #tpu.memory_space<vmem>>, vector<8x32xf32>,
    return
  }
  func.func @transform_0(%arg0: i32, %arg1: i32) -> (i32, i32) {
    %c2_i32 = arith.constant 2 : i32
    %0 = arith.muli %arg0, %c2_i32 : i32
    %1 = arith.addi %0, %arg1 : i32
    %c1_i32 = arith.constant 1 : i32
    %2 = arith.minsi %1, %c1_i32 : i32
    %c0_i32 = arith.constant 0 : i32
    %c0_i32_0 = arith.constant 0 : i32
    return %2, %c0_i32 : i32, i32
  }
  func.func @transform_1(%arg0: i32, %arg1: i32) -> (i32, i32) {
    %c0_i32 = arith.constant 0 : i32
    %c0_i32_0 = arith.constant 0 : i32
    return %arg0, %c0_i32 : i32, i32
  }
}

</mosaic_0001>

<llo_original>
// kernel: gaussian_prior_loss.1
$region0: #{gaussian_prior_loss.1}
  #allocation0 [shape = 'u32[]', space=smem, size = 0x4, offset = 0x4, fixed_abs, tag = 'smem constant byte address 0x4 - core index']
  #allocation1 [shape = 'u32[144,128]{1,0:T(1,128)}', space=vmem, size = 0x12000, scoped, tag = 'internal scratch']
  %s0 = inlined_call_operand.hbm [shape: f32[16,32], index: 0, kind: input, shape index: {}]
  %s1 = inlined_call_operand.vmem [shape: f32[8,32], index: 1, kind: output, shape index: {}]
  %s2 = sld [smem:[#allocation0]]
  $region45: #{gaussian_prior_loss.1} parent=0
    _
  %s4 = ssub.s32 1, %s2
  %s5 = scalar_select 0, %s4, %s2
  $region1: #{gaussian_prior_loss.1} parent=0
    #allocation2 [shape = 'u8[8192]{0}', space=vmem, size = 0x2000, scoped, tag = 'input window, operand 0']
    #allocation3 [shape = 's32[2]{0}', space=sflag, size = 0x8, scoped, tag = 'scoped memory for gaussian_prior_loss.1']
    %6 = vsyncpa [#allocation3], 0
    %s7 = scalar_lea.sflag [#allocation3], 1
    %8 = vsyncpa %s7, 0
    loop: start=0, step=1, limit=4
    $region2: #{gaussian_prior_loss.1} parent=1 // loop_pre_header
      _
    $region3: #{gaussian_prior_loss.1} parent=1 // loop_header
      %s10 = sphi 0, %s14
      %p11 = scmp.ge.s32.totalorder %s10, 4
      %s17 = sphi 0, %s29
      %s18 = sphi 0, %s25
      %s19 = sphi 0, %s17
      %s20 = sphi 0, %s18
      %s21 = sphi 0, %s19
      %s22 = sphi 0, %s20
      %s40 = sphi 0, %s42
      %s43 = sphi 0, %s40
      %s44 = sphi 0, %s43
      %s60 = sphi 0, %s44
      %s66 = sphi 0, %s68
      %s69 = sphi 0, %s66
      %s70 = sphi 0, %s69
      %s86 = sphi 0, %s70
    $region4: #{gaussian_prior_loss.1} parent=1 // loop_header_branch
      %13 = sbr.rel (%p11) target = $region8
    $region5: #{gaussian_prior_loss.1} parent=1 // loop_body
      %s15 = ssub.s32 %s10, 1
      %s16 = ssub.s32 %s10, 2
      %s23 = sadd.s32 1, %s18
      %p24 = scmp.ge.s32.totalorder %s23, 2
      %s25 = scalar_select %p24, 0, %s23
      %s26 = sadd.s32 1, %s17
      %s27 = scalar_select %p24, %s26, %s17
      %p28 = scmp.ge.s32.totalorder %s27, 1
      %s29 = scalar_select %p28, 0, %s27
      %s30 = smul.u32 %s17, 2
      %s31 = sadd.s32 %s30, %s18
      %p32 = scmp.lt.s32.totalorder %s31, 1
      %s33 = scalar_select %p32, %s31, 1
      %s34 = smul.u32 %s29, 2
      %s35 = sadd.s32 %s34, %s25
      %p36 = scmp.lt.s32.totalorder %s35, 1
      %s37 = scalar_select %p36, %s35, 1
      %s38 = ssub.s32 %s33, %s37
      %p39 = scmp.eq.s32.totalorder %s38, 0
      %s41 = sadd.s32 %s40, 1
      %s42 = scalar_select %p39, %s40, %s41
      %p45 = pneg %p39
      %p46 = scmp.eq.s32.totalorder %s10, 1
      %p47 = por %p45, %p46
      %p48 = scmp.ne.s32.totalorder %s40, %s43
      %p49 = scmp.eq.s32.totalorder %s10, 0
      %p50 = por %p48, %p49
      %p51 = scmp.ne.s32.totalorder %s40, %s43
      %p52 = scmp.eq.s32.totalorder %s15, 1
      %p53 = por %p51, %p52
      %p54 = scmp.ne.s32.totalorder %s43, %s44
      %p55 = scmp.eq.s32.totalorder %s15, 0
      %p56 = por %p54, %p55
      %p57 = scmp.ne.s32.totalorder %s43, %s44
      %p58 = scmp.eq.s32.totalorder %s16, 1
      %p59 = por %p57, %p58
      %p61 = scmp.ne.s32.totalorder %s44, %s60
      %p62 = scmp.eq.s32.totalorder %s16, 0
      %p63 = por %p61, %p62
      %s64 = ssub.s32 %s17, %s29
      %p65 = scmp.eq.s32.totalorder %s64, 0
      %s67 = sadd.s32 %s66, 1
      %s68 = scalar_select %p65, %s66, %s67
      %p71 = pneg %p65
      %p72 = scmp.eq.s32.totalorder %s10, 1
      %p73 = por %p71, %p72
      %p74 = scmp.ne.s32.totalorder %s66, %s69
      %p75 = scmp.eq.s32.totalorder %s10, 0
      %p76 = por %p74, %p75
      %p77 = scmp.ne.s32.totalorder %s66, %s69
      %p78 = scmp.eq.s32.totalorder %s15, 1
      %p79 = por %p77, %p78
      %p80 = scmp.ne.s32.totalorder %s69, %s70
      %p81 = scmp.eq.s32.totalorder %s15, 0
      %p82 = por %p80, %p81
      %p83 = scmp.ne.s32.totalorder %s69, %s70
      %p84 = scmp.eq.s32.totalorder %s16, 1
      %p85 = por %p83, %p84
      %p87 = scmp.ne.s32.totalorder %s70, %s86
      %p88 = scmp.eq.s32.totalorder %s16, 0
      %p89 = por %p87, %p88
      %p90 = scmp.le.s32.totalorder 1, %s10
      %p91 = scmp.lt.s32.totalorder %s10, 3
      %p92 = pnand %p90, %p91
      %p93 = pneg %p92
      // Predicated region
      $region9: #{gaussian_prior_loss.1} parent=5 // pred_check
        _
      $region10: #{gaussian_prior_loss.1} parent=5 // pred_check_branch
        %95 = sbr.rel (%p92) target = $region12
      $region11: #{gaussian_prior_loss.1} parent=5 // pred_region
        %s96 = ssub.s32 %s10, 1
      $region12: #{gaussian_prior_loss.1} parent=5 // pred_fallthru
        _
      %p97 = scmp.lt.s32.totalorder %s10, 2
      // Predicated region
      $region13: #{gaussian_prior_loss.1} parent=5 // pred_check
        %p98 = pneg %p97
      $region14: #{gaussian_prior_loss.1} parent=5 // pred_check_branch
        %100 = sbr.rel (%p98) target = $region16
      $region15: #{gaussian_prior_loss.1} parent=5 // pred_region
        // Predicated region
        $region17: #{gaussian_prior_loss.1} parent=15 // pred_check
          %p101 = pneg %p50
        $region18: #{gaussian_prior_loss.1} parent=15 // pred_check_branch
          %103 = sbr.rel (%p101) target = $region20
        $region19: #{gaussian_prior_loss.1} parent=15 // pred_region
          %s104 = sand.u32 %s40, 1
          %s105 = scalar_lea.sflag [#allocation3], %s104
          %s106 = sand.u32 %s40, 1
          %s107 = smul.addr %s106, 8
          %s108 = scalar_lea.vmem [#allocation2], %s107
          %s109 = smul.u32 %s17, 2
          %s110 = sadd.s32 %s109, %s18
          %p111 = scmp.lt.s32.totalorder %s110, 1
          %s112 = scalar_select %p111, %s110, 1
          %s114 = ssub.s32 128, 128
          %115 = vsyncadd %s105, %s114
          %s116 = smul.addr %s112, 128
          %s117 = scalar_lea.hbm %s0, %s116
          %s119 = sshll.u32 %s108, 4
          %s120 = int_to_ptr.vmem [resolvable:$true] %s119
          %122 = dma.hbm_to_vmem [thread:$0]  %s117, 128, %s120, %s105
        $region20: #{gaussian_prior_loss.1} parent=15 // pred_fallthru
          _
      $region16: #{gaussian_prior_loss.1} parent=5 // pred_fallthru
        _
      %p123 = scmp.le.s32.totalorder 1, %s10
      %p124 = scmp.lt.s32.totalorder %s10, 3
      %p125 = pnand %p123, %p124
      %p126 = pneg %p125
      // Predicated region
      $region21: #{gaussian_prior_loss.1} parent=5 // pred_check
        _
      $region22: #{gaussian_prior_loss.1} parent=5 // pred_check_branch
        %128 = sbr.rel (%p125) target = $region24
      $region23: #{gaussian_prior_loss.1} parent=5 // pred_region
        %s129 = ssub.s32 %s10, 1
        %s130 = sand.u32 %s43, 1
        %s131 = scalar_lea.sflag [#allocation3], %s130
        %s132 = sand.u32 %s43, 1
        %s133 = smul.addr %s132, 8
        %s134 = scalar_lea.vmem [#allocation2], %s133
        // Predicated region
        $region25: #{gaussian_prior_loss.1} parent=23 // pred_check
          %p135 = pneg %p56
        $region26: #{gaussian_prior_loss.1} parent=23 // pred_check_branch
          %137 = sbr.rel (%p135) target = $region28
        $region27: #{gaussian_prior_loss.1} parent=23 // pred_region
          %138 = dma.done %s131, 128
        $region28: #{gaussian_prior_loss.1} parent=23 // pred_fallthru
          _
        %s139 = sand.u32 %s43, 1
        %s140 = scalar_lea.sflag [#allocation3], %s139
        %s141 = sand.u32 %s43, 1
        %s142 = smul.addr %s141, 8
        %s143 = scalar_lea.vmem [#allocation2], %s142
        %p144 = pneg %p56
        %p145 = pneg %p53
        %p146 = pneg %p82
        %p147 = pneg %p79
        %p148 = scmp.lt.s32.totalorder %s19, 0
        %s149 = scalar_select %p148, %s19, 0
        %s150 = smul.addr %s149, 8
        %s151 = scalar_lea.vmem %s1, %s150
        %s152 = smul.u32 %s19, 2
        %s153 = sadd.s32 %s152, %s20
        %p154 = scmp.lt.s32.totalorder %s153, 1
        %s155 = scalar_select %p154, %s153, 1
        %p156 = scmp.lt.s32.totalorder %s19, 0
        %s157 = scalar_select %p156, %s19, 0
        %s158 = smul.addr %s157, 8
        %s159 = scalar_lea.vmem %s1, %s158
        %p160 = scmp.eq.s32.totalorder %s20, 0
        // Predicated region
        $region29: #{gaussian_prior_loss.1} parent=23 // pred_check
          %p161 = pneg %p160
        $region30: #{gaussian_prior_loss.1} parent=23 // pred_check_branch
          %163 = sbr.rel (%p161) target = $region32
        $region31: #{gaussian_prior_loss.1} parent=23 // pred_region
          %vm164 = vcmask 261120
          %165 = vst.msk [vmem:[%s159] sm:$0xff] %vm164, 0.0
        $region32: #{gaussian_prior_loss.1} parent=23 // pred_fallthru
          _
        %v166 = vld [vmem:[%s134] sm:$0xff]
        %v167 = vmul.f32 %v166, %v166
        %v168 = vadd.f32 %v167, 0.0
        %v169 = vadd.f32 %v168, 0.0
        %v170 = vld [vmem:[%s159] sm:$0xff]
        %v171 = vadd.f32 %v170, %v169
        %vm172 = vcmask 261120
        %173 = vst.msk [vmem:[%s159] sm:$0xff] %vm172, %v171
        %p174 = scmp.lt.s32.totalorder %s19, 0
        %s175 = scalar_select %p174, %s19, 0
        %s176 = smul.addr %s175, 8
        %s177 = scalar_lea.vmem %s1, %s176
        // Predicated region
        $region33: #{gaussian_prior_loss.1} parent=23 // pred_check
          %p178 = pneg %p79
        $region34: #{gaussian_prior_loss.1} parent=23 // pred_check_branch
          %180 = sbr.rel (%p178) target = $region36
        $region35: #{gaussian_prior_loss.1} parent=23 // pred_region
          _
        $region36: #{gaussian_prior_loss.1} parent=23 // pred_fallthru
          _
        // Predicated region
        $region37: #{gaussian_prior_loss.1} parent=23 // pred_check
          %p181 = pneg %p79
        $region38: #{gaussian_prior_loss.1} parent=23 // pred_check_branch
          %183 = sbr.rel (%p181) target = $region40
        $region39: #{gaussian_prior_loss.1} parent=23 // pred_region
          %p184 = scmp.lt.s32.totalorder %s19, 0
          %s185 = scalar_select %p184, %s19, 0
          %s186 = smul.addr %s185, 8
          %s187 = scalar_lea.vmem %s1, %s186
        $region40: #{gaussian_prior_loss.1} parent=23 // pred_fallthru
          _
      $region24: #{gaussian_prior_loss.1} parent=5 // pred_fallthru
        _
      %p188 = scmp.le.s32.totalorder 2, %s10
      // Predicated region
      $region41: #{gaussian_prior_loss.1} parent=5 // pred_check
        %p189 = pneg %p188
      $region42: #{gaussian_prior_loss.1} parent=5 // pred_check_branch
        %191 = sbr.rel (%p189) target = $region44
      $region43: #{gaussian_prior_loss.1} parent=5 // pred_region
        %s192 = ssub.s32 %s10, 2
      $region44: #{gaussian_prior_loss.1} parent=5 // pred_fallthru
        _
    $region6: #{gaussian_prior_loss.1} parent=1 // loop_footer
      %s14 = sadd.s32 1, %s10
    $region7: #{gaussian_prior_loss.1} parent=1 // loop_footer_branch
      %9 = sbr.rel target = $region3
    $region8: #{gaussian_prior_loss.1} parent=1 // loop_exit
      _
    %193 = vsyncpa [#allocation3], 1
    %s194 = scalar_lea.sflag [#allocation3], 1
    %195 = vsyncpa %s194, 1

</llo_original>
